<compile_context>
chip_gen: v6e
topology: v6e:2x2x1
jax: 0.10.0
libtpu: 0.0.40
codegen_flags: <defaults>
</compile_context>

<pallas_src>
import math

import jax
import jax.numpy as jnp
from jax.experimental import pallas as pl
from jax.experimental.pallas import tpu as pltpu

HIDDEN_X = 32    # hidden_X
HIDDEN_T = 16    # hidden_t
HEADS = 4
N_NODES = 16
HN = HEADS * N_NODES      # 64  (head-stacked node axis)
HD = HEADS * HIDDEN_X     # 128 (head-stacked feature axis)
LN_EPS = 1e-5             # PyTorch LayerNorm default

# Lane offsets inside the fused projection output proj[HN, HD].
Q_OFF = 0
K_OFF = HIDDEN_X           # 32
V_OFF = 2 * HIDDEN_X       # 64
S_OFF = 3 * HIDDEN_X       # 96  (root / skip projection, valid in rows 0:N)

# Row offsets inside the packed parameter slab pack[PACK_ROWS, HD].
W_PROJ_ROW = 0                              # [128,128] block-diag Wq|Wk|Wv|Wskip
B_PROJ_ROW = HD                             # 128: [64,128] per-row projection biases
W2_ROW = B_PROJ_ROW + HN                    # 192: [48,32] = [W1a; W1t]
B1_ROW = W2_ROW + HIDDEN_X + HIDDEN_T       # 240: [1,32] update_X bias
GAMMA_ROW = B1_ROW + 8                      # 248: [1,32] LayerNorm gamma
BETA_ROW = GAMMA_ROW + 8                    # 256: [1,32] LayerNorm beta
PACK_ROWS = BETA_ROW + 8                    # 264


def att_layer_kernel(x_ref, ht_ref, adjblk_ref, p_ref, o_ref):
    """Fused TransformerConv(heads=4, concat=False) + Linear/ReLU/LayerNorm."""
    x = x_ref[...]                                   # [N, D]
    zeros = jnp.zeros_like(x)

    # Block-diagonal replication of x -> [H*N, H*D]: row block h only touches the
    # weight rows of head h in the packed projection matrix.
    row_blocks = []
    for h in range(HEADS):                           # static, unrolled (4 iters)
        blk = [zeros] * HEADS
        blk[h] = x
        row_blocks.append(jnp.concatenate(blk, axis=1))      # [N, H*D]
    x_blk = jnp.concatenate(row_blocks, axis=0)              # [H*N, H*D]

    # ONE MXU pass: head-stacked Q | K | V and the root/skip projection.
    proj = (jnp.dot(x_blk, p_ref[W_PROJ_ROW:W_PROJ_ROW + HD, :],
                    preferred_element_type=jnp.float32)
            + p_ref[B_PROJ_ROW:B_PROJ_ROW + HN, :])           # [H*N, H*D]
    q = proj[:, Q_OFF:Q_OFF + HIDDEN_X]                       # [H*N, D] (1/sqrt(d) folded)
    k = proj[:, K_OFF:K_OFF + HIDDEN_X]                       # [H*N, D]
    v = proj[:, V_OFF:V_OFF + HIDDEN_X]                       # [H*N, D] (1/heads folded)

    # Every head's attention scores in ONE matmul; the static block-diagonal
    # adjacency mask kills both non-edges and cross-head blocks.
    adjblk = adjblk_ref[...]                                  # [H*N, H*N]
    s = jax.lax.dot_general(q, k, (((1,), (1,)), ((), ())),
                            preferred_element_type=jnp.float32)
    s = s + (adjblk - 1.0) * 1e30                             # additive mask
    m = jnp.max(s, axis=-1, keepdims=True)
    p = adjblk * jnp.exp(s - m)                               # exact zeros off-graph
    denom = jnp.sum(p, axis=-1, keepdims=True)
    # EUP reciprocal (approx) for the softmax denominator.
    alpha = p * pl.reciprocal(jnp.maximum(denom, 1e-30), approx=True)

    # ONE matmul aggregates all heads; mean over heads (already folded into v) is a
    # 3-add reduction over the sublane blocks, plus the skip connection.
    agg = jnp.dot(alpha, v, preferred_element_type=jnp.float32)   # [H*N, D]
    h_att = proj[0:N_NODES, S_OFF:S_OFF + HIDDEN_X]               # skip(x) = x @ Wskip + bskip
    for h in range(HEADS):
        h_att = h_att + agg[h * N_NODES:(h + 1) * N_NODES, :]

    # update_X: Linear(cat([h_att, h_t])) -> ReLU -> LayerNorm.
    ht_b = jnp.broadcast_to(ht_ref[...], (N_NODES, HIDDEN_T))     # h_t expand
    cat = jnp.concatenate([h_att, ht_b], axis=1)                  # [N, D + hT]
    z = (jnp.dot(cat, p_ref[W2_ROW:W2_ROW + HIDDEN_X + HIDDEN_T, 0:HIDDEN_X],
                 preferred_element_type=jnp.float32)
         + p_ref[B1_ROW:B1_ROW + 1, 0:HIDDEN_X])
    z = jnp.maximum(z, 0.0)                                       # ReLU

    mu = jnp.mean(z, axis=-1, keepdims=True)
    var = jnp.mean((z - mu) ** 2, axis=-1, keepdims=True)
    zn = (z - mu) * jax.lax.rsqrt(var + LN_EPS)
    # TODO(synk): nn.Dropout omitted (identity in eval mode).
    o_ref[...] = (zn * p_ref[GAMMA_ROW:GAMMA_ROW + 1, 0:HIDDEN_X]
                  + p_ref[BETA_ROW:BETA_ROW + 1, 0:HIDDEN_X])


def build_adj(edge_index, num_nodes):
    """Dense adjacency mask adj[target, source] = 1."""
    src, dst = edge_index[0], edge_index[1]
    return jnp.zeros((num_nodes, num_nodes), jnp.float32).at[dst, src].set(1.0)


def build_adj_block(edge_index, num_nodes):
    """Block-diagonal (per-head) adjacency for the fused [H*N, H*N] softmax."""
    adj = build_adj(edge_index, num_nodes)
    return jnp.kron(jnp.eye(HEADS, dtype=jnp.float32), adj)       # [H*N, H*N]


def pack_params(params):
    """One-time host-side packing of all weights/biases into a single [264,128] slab."""
    scale = 1.0 / math.sqrt(HIDDEN_X)   # PyG TransformerConv score scale -> fold into Q
    inv_h = 1.0 / HEADS                 # mean over heads (concat=False)   -> fold into V

    pack = jnp.zeros((PACK_ROWS, HD), jnp.float32)
    for h in range(HEADS):
        r = h * HIDDEN_X
        n = h * N_NODES
        pack = pack.at[r:r + HIDDEN_X, Q_OFF:Q_OFF + HIDDEN_X].set(params["wq"][h] * scale)
        pack = pack.at[r:r + HIDDEN_X, K_OFF:K_OFF + HIDDEN_X].set(params["wk"][h])
        pack = pack.at[r:r + HIDDEN_X, V_OFF:V_OFF + HIDDEN_X].set(params["wv"][h] * inv_h)
        pack = pack.at[B_PROJ_ROW + n:B_PROJ_ROW + n + N_NODES,
                       Q_OFF:Q_OFF + HIDDEN_X].set(
            jnp.broadcast_to(params["bq"][h] * scale, (N_NODES, HIDDEN_X)))
        pack = pack.at[B_PROJ_ROW + n:B_PROJ_ROW + n + N_NODES,
                       K_OFF:K_OFF + HIDDEN_X].set(
            jnp.broadcast_to(params["bk"][h], (N_NODES, HIDDEN_X)))
        pack = pack.at[B_PROJ_ROW + n:B_PROJ_ROW + n + N_NODES,
                       V_OFF:V_OFF + HIDDEN_X].set(
            jnp.broadcast_to(params["bv"][h] * inv_h, (N_NODES, HIDDEN_X)))
    # Root / skip projection lives in head-0's weight rows (only rows 0:N are read).
    pack = pack.at[0:HIDDEN_X, S_OFF:S_OFF + HIDDEN_X].set(params["wskip"])
    pack = pack.at[B_PROJ_ROW:B_PROJ_ROW + N_NODES, S_OFF:S_OFF + HIDDEN_X].set(
        jnp.broadcast_to(params["bskip"], (N_NODES, HIDDEN_X)))
    # update_X linear: [W1a; W1t] and the small affine vectors.
    pack = pack.at[W2_ROW:W2_ROW + HIDDEN_X, 0:HIDDEN_X].set(params["w1a"])
    pack = pack.at[W2_ROW + HIDDEN_X:W2_ROW + HIDDEN_X + HIDDEN_T, 0:HIDDEN_X].set(params["w1t"])
    pack = pack.at[B1_ROW:B1_ROW + 1, 0:HIDDEN_X].set(params["b1"])
    pack = pack.at[GAMMA_ROW:GAMMA_ROW + 1, 0:HIDDEN_X].set(params["gamma"])
    pack = pack.at[BETA_ROW:BETA_ROW + 1, 0:HIDDEN_X].set(params["beta"])
    return pack


@jax.jit
def att_layer_forward(adjblk, h_X, h_t, pack):
    """adjblk: [H*N, H*N] block-diag mask, h_X: [N, hX], h_t: [1, hT], pack: pack_params()."""
    vmem = pl.BlockSpec(memory_space=pltpu.MemorySpace.VMEM)
    return pl.pallas_call(
        att_layer_kernel,
        out_shape=jax.ShapeDtypeStruct((N_NODES, HIDDEN_X), jnp.float32),
        in_specs=[vmem] * 4,
        out_specs=vmem,
    )(h_X, h_t, adjblk, pack)


def make_params(key):
    ks = jax.random.split(key, 11)

    def w(k, shape, scale=0.1):
        return (scale * jax.random.normal(k, shape)).astype(jnp.float32)

    return dict(
        # per-head projection weights stored as [H, in, out] (i.e. W.T per head)
        wq=w(ks[0], (HEADS, HIDDEN_X, HIDDEN_X)), bq=w(ks[1], (HEADS, 1, HIDDEN_X)),
        wk=w(ks[2], (HEADS, HIDDEN_X, HIDDEN_X)), bk=w(ks[3], (HEADS, 1, HIDDEN_X)),
        wv=w(ks[4], (HEADS, HIDDEN_X, HIDDEN_X)), bv=w(ks[5], (HEADS, 1, HIDDEN_X)),
        wskip=w(ks[6], (HIDDEN_X, HIDDEN_X)), bskip=w(ks[7], (1, HIDDEN_X)),
        # update_X linear split into the h_att part and the h_t part of the concat
        w1a=w(ks[8], (HIDDEN_X, HIDDEN_X)),
        w1t=w(ks[9], (HIDDEN_T, HIDDEN_X)),
        b1=w(ks[10], (1, HIDDEN_X)),
        gamma=jnp.ones((1, HIDDEN_X), jnp.float32),
        beta=jnp.zeros((1, HIDDEN_X), jnp.float32),
    )


def reference(edge_index, h_X, h_t, params):
    """Pure-JAX reference of the same math (validates the Pallas lowering)."""
    n = h_X.shape[0]
    adj = build_adj(edge_index, n)
    acc = jnp.zeros((n, HIDDEN_X), jnp.float32)
    for h in range(HEADS):
        q = h_X @ params["wq"][h] + params["bq"][h]
        k = h_X @ params["wk"][h] + params["bk"][h]
        v = h_X @ params["wv"][h] + params["bv"][h]
        scores = (q @ k.T) / math.sqrt(HIDDEN_X)
        masked = jnp.where(adj > 0, scores, -1e30)
        m = masked.max(-1, keepdims=True)
        p = jnp.where(adj > 0, jnp.exp(masked - m), 0.0)
        s = p.sum(-1, keepdims=True)
        acc = acc + (p / jnp.maximum(s, 1e-30)) @ v
    acc = acc / HEADS
    h_att = acc + h_X @ params["wskip"] + params["bskip"]
    z = h_att @ params["w1a"] + h_t @ params["w1t"] + params["b1"]
    z = jnp.maximum(z, 0.0)
    mu = z.mean(-1, keepdims=True)
    var = ((z - mu) ** 2).mean(-1, keepdims=True)
    zn = (z - mu) / jnp.sqrt(var + LN_EPS)
    return zn * params["gamma"] + params["beta"]


if __name__ == "__main__":
    key = jax.random.PRNGKey(0)
    kx, kt, kp = jax.random.split(key, 3)

    h_X = jax.random.normal(kx, (N_NODES, HIDDEN_X), dtype=jnp.float32)
    h_t = jax.random.normal(kt, (1, HIDDEN_T), dtype=jnp.float32)

    # Deterministic ring graph: every node i receives edges from i-1 and i-2.
    idx = jnp.arange(N_NODES, dtype=jnp.int32)
    src = jnp.concatenate([idx, idx])
    dst = jnp.concatenate([(idx + 1) % N_NODES, (idx + 2) % N_NODES])
    edge_index = jnp.stack([src, dst])              # [2, 2N]

    params = make_params(kp)
    pack = pack_params(params)                      # one-time host-side packing
    adjblk = build_adj_block(edge_index, N_NODES)   # static graph -> hoisted

    out = att_layer_forward(adjblk, h_X, h_t, pack)
    out = jax.block_until_ready(out)

    ref = reference(edge_index, h_X, h_t, params)
    assert out.shape == (N_NODES, HIDDEN_X)
    # approx (EUP) reciprocal in the softmax denominator => slightly looser tolerance
    max_diff = float(jnp.max(jnp.abs(out - ref)))
    assert jnp.allclose(out, ref, atol=2e-3, rtol=2e-3), f"max abs diff {max_diff}"

    print("KERNEL_OK")
</pallas_src>

<mosaic_0001>
module attributes {stable_mosaic.version = 11 : i64} {
  func.func @att_layer_kernel(%arg0: memref<16x32xf32, #tpu.memory_space<vmem>>, %arg1: memref<1x16xf32, #tpu.memory_space<vmem>>, %arg2: memref<64x64xf32, #tpu.memory_space<vmem>>, %arg3: memref<264x128xf32, #tpu.memory_space<vmem>>, %arg4: memref<16x32xf32, #tpu.memory_space<vmem>>) attributes {dimension_semantics = [], scalar_prefetch = 0 : i64, scratch_operands = 0 : i64, tpu.core_type = #tpu.core_type<tc>} {
    %c0 = arith.constant 0 : index
    %c0_0 = arith.constant 0 : index
    %0 = vector.load %arg0[%c0, %c0_0] : memref<16x32xf32, #tpu.memory_space<vmem>>, vector<16x32xf32>
    %cst = arith.constant 0.000000e+00 : f32
    %1 = vector.broadcast %cst : f32 to vector<16x32xf32>
    %2 = tpu.concatenate %0, %1, %1, %1 in 1 : vector<16x32xf32>, vector<16x32xf32>, vector<16x32xf32>, vector<16x32xf32> -> vector<16x128xf32>
    %3 = tpu.concatenate %1, %0, %1, %1 in 1 : vector<16x32xf32>, vector<16x32xf32>, vector<16x32xf32>, vector<16x32xf32> -> vector<16x128xf32>
    %4 = tpu.concatenate %1, %1, %0, %1 in 1 : vector<16x32xf32>, vector<16x32xf32>, vector<16x32xf32>, vector<16x32xf32> -> vector<16x128xf32>
    %5 = tpu.concatenate %1, %1, %1, %0 in 1 : vector<16x32xf32>, vector<16x32xf32>, vector<16x32xf32>, vector<16x32xf32> -> vector<16x128xf32>
    %6 = tpu.concatenate %2, %3, %4, %5 in 0 : vector<16x128xf32>, vector<16x128xf32>, vector<16x128xf32>, vector<16x128xf32> -> vector<64x128xf32>
    %c0_1 = arith.constant 0 : index
    %c0_2 = arith.constant 0 : index
    %7 = vector.load %arg3[%c0_1, %c0_2] : memref<264x128xf32, #tpu.memory_space<vmem>>, vector<128x128xf32>
    %cst_3 = arith.constant dense<0.000000e+00> : vector<64x128xf32>
    %8 = tpu.matmul %6, %7, %cst_3 {dimension_numbers = #tpu.dot_dimension_numbers<[1], [0], [0], [1], [0, 0, 1, 1], [], []>} : vector<64x128xf32>, vector<128x128xf32>, vector<64x128xf32> -> vector<64x128xf32>
    %c128 = arith.constant 128 : index
    %c0_4 = arith.constant 0 : index
    %9 = vector.load %arg3[%c128, %c0_4] : memref<264x128xf32, #tpu.memory_space<vmem>>, vector<64x128xf32>
    %10 = arith.addf %8, %9 : vector<64x128xf32>
    %11 = vector.extract_strided_slice %10 {offsets = [0, 0], sizes = [64, 32], strides = [1, 1]} : vector<64x128xf32> to vector<64x32xf32>
    %12 = vector.extract_strided_slice %10 {offsets = [0, 32], sizes = [64, 32], strides = [1, 1]} : vector<64x128xf32> to vector<64x32xf32>
    %13 = vector.extract_strided_slice %10 {offsets = [0, 64], sizes = [64, 32], strides = [1, 1]} : vector<64x128xf32> to vector<64x32xf32>
    %c0_5 = arith.constant 0 : index
    %c0_6 = arith.constant 0 : index
    %14 = vector.load %arg2[%c0_5, %c0_6] : memref<64x64xf32, #tpu.memory_space<vmem>>, vector<64x64xf32>
    %cst_7 = arith.constant dense<0.000000e+00> : vector<64x64xf32>
    %15 = tpu.matmul %11, %12, %cst_7 {dimension_numbers = #tpu.dot_dimension_numbers<[1], [1], [0], [0], [0, 0, 1, 0], [], []>} : vector<64x32xf32>, vector<64x32xf32>, vector<64x64xf32> -> vector<64x64xf32>
    %cst_8 = arith.constant 1.000000e+00 : f32
    %16 = vector.broadcast %cst_8 : f32 to vector<64x64xf32>
    %17 = arith.subf %14, %16 : vector<64x64xf32>
    %cst_9 = arith.constant 1.000000e+30 : f32
    %18 = vector.broadcast %cst_9 : f32 to vector<64x64xf32>
    %19 = arith.mulf %17, %18 : vector<64x64xf32>
    %20 = arith.addf %15, %19 : vector<64x64xf32>
    %cst_10 = arith.constant dense<0xFF800000> : vector<64xf32>
    %21 = vector.multi_reduction <maximumf>, %20, %cst_10 [1] : vector<64x64xf32> to vector<64xf32>
    %22 = vector.shape_cast %21 : vector<64xf32> to vector<64x1xf32>
    %23 = vector.broadcast %22 : vector<64x1xf32> to vector<64x64xf32>
    %24 = arith.subf %20, %23 : vector<64x64xf32>
    %25 = math.exp %24 : vector<64x64xf32>
    %26 = arith.mulf %14, %25 : vector<64x64xf32>
    %cst_11 = arith.constant dense<0.000000e+00> : vector<64xf32>
    %27 = vector.multi_reduction <add>, %26, %cst_11 [1] : vector<64x64xf32> to vector<64xf32>
    %28 = vector.shape_cast %27 : vector<64xf32> to vector<64x1xf32>
    %cst_12 = arith.constant 1.000000e-30 : f32
    %29 = vector.broadcast %cst_12 : f32 to vector<64x1xf32>
    %30 = arith.maximumf %28, %29 : vector<64x1xf32>
    %31 = tpu.reciprocal %30 {approx = true} : vector<64x1xf32> -> vector<64x1xf32>
    %32 = vector.broadcast %31 : vector<64x1xf32> to vector<64x64xf32>
    %33 = arith.mulf %26, %32 : vector<64x64xf32>
    %cst_13 = arith.constant dense<0.000000e+00> : vector<64x32xf32>
    %34 = tpu.matmul %33, %13, %cst_13 {dimension_numbers = #tpu.dot_dimension_numbers<[1], [0], [0], [1], [0, 0, 1, 1], [], []>} : vector<64x64xf32>, vector<64x32xf32>, vector<64x32xf32> -> vector<64x32xf32>
    %35 = vector.extract_strided_slice %10 {offsets = [0, 96], sizes = [16, 32], strides = [1, 1]} : vector<64x128xf32> to vector<16x32xf32>
    %36 = vector.extract_strided_slice %34 {offsets = [0, 0], sizes = [16, 32], strides = [1, 1]} : vector<64x32xf32> to vector<16x32xf32>
    %37 = arith.addf %35, %36 : vector<16x32xf32>
    %38 = vector.extract_strided_slice %34 {offsets = [16, 0], sizes = [16, 32], strides = [1, 1]} : vector<64x32xf32> to vector<16x32xf32>
    %39 = arith.addf %37, %38 : vector<16x32xf32>
    %40 = vector.extract_strided_slice %34 {offsets = [32, 0], sizes = [16, 32], strides = [1, 1]} : vector<64x32xf32> to vector<16x32xf32>
    %41 = arith.addf %39, %40 : vector<16x32xf32>
    %42 = vector.extract_strided_slice %34 {offsets = [48, 0], sizes = [16, 32], strides = [1, 1]} : vector<64x32xf32> to vector<16x32xf32>
    %43 = arith.addf %41, %42 : vector<16x32xf32>
    %c0_14 = arith.constant 0 : index
    %c0_15 = arith.constant 0 : index
    %44 = vector.load %arg1[%c0_14, %c0_15] : memref<1x16xf32, #tpu.memory_space<vmem>>, vector<1x16xf32>
    %45 = vector.shape_cast %44 : vector<1x16xf32> to vector<1x16xf32>
    %46 = vector.broadcast %45 : vector<1x16xf32> to vector<16x16xf32>
    %47 = tpu.concatenate %43, %46 in 1 : vector<16x32xf32>, vector<16x16xf32> -> vector<16x48xf32>
    %c192 = arith.constant 192 : index
    %c0_16 = arith.constant 0 : index
    %48 = vector.load %arg3[%c192, %c0_16] : memref<264x128xf32, #tpu.memory_space<vmem>>, vector<48x32xf32>
    %cst_17 = arith.constant dense<0.000000e+00> : vector<16x32xf32>
    %49 = tpu.matmul %47, %48, %cst_17 {dimension_numbers = #tpu.dot_dimension_numbers<[1], [0], [0], [1], [0, 0, 1, 1], [], []>} : vector<16x48xf32>, vector<48x32xf32>, vector<16x32xf32> -> vector<16x32xf32>
    %c240 = arith.constant 240 : index
    %c0_18 = arith.constant 0 : index
    %50 = vector.load %arg3[%c240, %c0_18] : memref<264x128xf32, #tpu.memory_space<vmem>>, vector<1x32xf32>
    %51 = vector.broadcast %50 : vector<1x32xf32> to vector<16x32xf32>
    %52 = arith.addf %49, %51 : vector<16x32xf32>
    %cst_19 = arith.constant 0.000000e+00 : f32
    %53 = vector.broadcast %cst_19 : f32 to vector<16x32xf32>
    %54 = arith.maximumf %52, %53 : vector<16x32xf32>
    %cst_20 = arith.constant dense<0.000000e+00> : vector<16xf32>
    %55 = vector.multi_reduction <add>, %54, %cst_20 [1] : vector<16x32xf32> to vector<16xf32>
    %56 = vector.shape_cast %55 : vector<16xf32> to vector<16x1xf32>
    %cst_21 = arith.constant 3.200000e+01 : f32
    %57 = vector.broadcast %cst_21 : f32 to vector<16x1xf32>
    %58 = arith.divf %56, %57 : vector<16x1xf32>
    %59 = vector.broadcast %58 : vector<16x1xf32> to vector<16x32xf32>
    %60 = arith.subf %54, %59 : vector<16x32xf32>
    %61 = arith.mulf %60, %60 : vector<16x32xf32>
    %cst_22 = arith.constant dense<0.000000e+00> : vector<16xf32>
    %62 = vector.multi_reduction <add>, %61, %cst_22 [1] : vector<16x32xf32> to vector<16xf32>
    %63 = vector.shape_cast %62 : vector<16xf32> to vector<16x1xf32>
    %cst_23 = arith.constant 3.200000e+01 : f32
    %64 = vector.broadcast %cst_23 : f32 to vector<16x1xf32>
    %65 = arith.divf %63, %64 : vector<16x1xf32>
    %66 = vector.broadcast %58 : vector<16x1xf32> to vector<16x32xf32>
    %67 = arith.subf %54, %66 : vector<16x32xf32>
    %cst_24 = arith.constant 9.99999974E-6 : f32
    %68 = vector.broadcast %cst_24 : f32 to vector<16x1xf32>
    %69 = arith.addf %65, %68 : vector<16x1xf32>
    %70 = math.rsqrt %69 : vector<16x1xf32>
    %71 = vector.broadcast %70 : vector<16x1xf32> to vector<16x32xf32>
    %72 = arith.mulf %67, %71 : vector<16x32xf32>
    %c248 = arith.constant 248 : index
    %c0_25 = arith.constant 0 : index
    %73 = vector.load %arg3[%c248, %c0_25] : memref<264x128xf32, #tpu.memory_space<vmem>>, vector<1x32xf32>
    %74 = vector.broadcast %73 : vector<1x32xf32> to vector<16x32xf32>
    %75 = arith.mulf %72, %74 : vector<16x32xf32>
    %c256 = arith.constant 256 : index
    %c0_26 = arith.constant 0 : index
    %76 = vector.load %arg3[%c256, %c0_26] : memref<264x128xf32, #tpu.memory_space<vmem>>, vector<1x32xf32>
    %77 = vector.broadcast %76 : vector<1x32xf32> to vector<16x32xf32>
    %78 = arith.addf %75, %77 : vector<16x32xf32>
    %c0_27 = arith.constant 0 : index
    %c0_28 = arith.constant 0 : index
    %79 = vector.load %arg4[%c0_27, %c0_28] : memref<16x32xf32, #tpu.memory_space<vmem>>, vector<16x32xf32>
    tpu.vector_store %arg4[%c0_27, %c0_28], %78 {strides = array<i32>} : memref<16x32xf32, #tpu.memory_space<vmem>>, vector<16x32xf32>,
    return
  }
}

</mosaic_0001>

<llo_original>
// kernel: att_layer_forward.1
$region0: #{att_layer_forward.1}
  #allocation0 [shape = 'u32[]', space=smem, size = 0x4, offset = 0x4, fixed_abs, tag = 'smem constant byte address 0x4 - core index']
  #allocation1 [shape = 'u32[144,128]{1,0:T(1,128)}', space=vmem, size = 0x12000, scoped, tag = 'internal scratch']
  %s0 = inlined_call_operand.hbm [shape: f32[16,32], index: 0, kind: input, shape index: {}]
  %s1 = inlined_call_operand.vmem [shape: f32[1,16], index: 1, kind: input, shape index: {}]
  %s2 = inlined_call_operand.hbm [shape: f32[64,64], index: 2, kind: input, shape index: {}]
  %s3 = inlined_call_operand.hbm [shape: f32[264,128], index: 3, kind: input, shape index: {}]
  %s4 = inlined_call_operand.hbm [shape: f32[16,32], index: 4, kind: output, shape index: {}]
  %s5 = sld [smem:[#allocation0]]
  $region38: #{att_layer_forward.1} parent=0
    _
  %s7 = ssub.s32 1, %s5
  %s8 = scalar_select 0, %s7, %s5
  $region1: #{att_layer_forward.1} parent=0
    #allocation2 [shape = 'u8[8192]{0}', space=vmem, size = 0x2000, scoped, tag = 'input window, operand 0, single buffered']
    #allocation3 [shape = 's32[1]{0}', space=sflag, size = 0x4, scoped, tag = 'scoped memory for att_layer_forward.1']
    #allocation4 [shape = 's32[1]{0}', space=sflag, size = 0x4, scoped, tag = 'scoped memory for att_layer_forward.1']
    #allocation5 [shape = 'u8[32768]{0}', space=vmem, size = 0x8000, scoped, tag = 'input window, operand 2, single buffered']
    #allocation6 [shape = 's32[1]{0}', space=sflag, size = 0x4, scoped, tag = 'scoped memory for att_layer_forward.1']
    #allocation7 [shape = 'u8[135168]{0}', space=vmem, size = 0x21000, scoped, tag = 'input window, operand 3, single buffered']
    #allocation8 [shape = 'u8[8192]{0}', space=vmem, size = 0x2000, scoped, tag = 'output window, operand 0, single buffered']
    %9 = vsyncpa [#allocation3], 0
    %10 = vsyncpa [#allocation6], 0
    %11 = vsyncpa [#allocation4], 0
    // Predicated region
    $region2: #{att_layer_forward.1} parent=1 // pred_check
      _
    $region3: #{att_layer_forward.1} parent=1 // pred_check_branch
      %13 = sbr.rel (0) target = $region5
    $region4: #{att_layer_forward.1} parent=1 // pred_region
      %s15 = ssub.s32 256, 256
      %16 = vsyncadd [#allocation3], %s15
      %s17 = sshll.u32 [#allocation2], 4
      %s18 = int_to_ptr.vmem [resolvable:$true] %s17
      %23 = dma.hbm_to_vmem [thread:$0]  %s0, 256, %s18, [#allocation3], 128, 128, 8
    $region5: #{att_layer_forward.1} parent=1 // pred_fallthru
      _
    // Predicated region
    $region6: #{att_layer_forward.1} parent=1 // pred_check
      _
    $region7: #{att_layer_forward.1} parent=1 // pred_check_branch
      %25 = sbr.rel (0) target = $region9
    $region8: #{att_layer_forward.1} parent=1 // pred_region
      _
    $region9: #{att_layer_forward.1} parent=1 // pred_fallthru
      _
    // Predicated region
    $region10: #{att_layer_forward.1} parent=1 // pred_check
      _
    $region11: #{att_layer_forward.1} parent=1 // pred_check_branch
      %27 = sbr.rel (0) target = $region13
    $region12: #{att_layer_forward.1} parent=1 // pred_region
      %s29 = ssub.s32 1024, 1024
      %30 = vsyncadd [#allocation6], %s29
      %s31 = sshll.u32 [#allocation5], 4
      %s32 = int_to_ptr.vmem [resolvable:$true] %s31
      %37 = dma.hbm_to_vmem [thread:$0]  %s2, 1024, %s32, [#allocation6], 128, 128, 8
    $region13: #{att_layer_forward.1} parent=1 // pred_fallthru
      _
    // Predicated region
    $region14: #{att_layer_forward.1} parent=1 // pred_check
      _
    $region15: #{att_layer_forward.1} parent=1 // pred_check_branch
      %39 = sbr.rel (0) target = $region17
    $region16: #{att_layer_forward.1} parent=1 // pred_region
      %s41 = ssub.s32 4224, 4224
      %42 = vsyncadd [#allocation6], %s41
      %s43 = sshll.u32 [#allocation7], 4
      %s44 = int_to_ptr.vmem [resolvable:$true] %s43
      %49 = dma.hbm_to_vmem [thread:$0]  %s3, 4224, %s44, [#allocation6], 128, 128, 8
    $region17: #{att_layer_forward.1} parent=1 // pred_fallthru
      _
    // Predicated region
    $region18: #{att_layer_forward.1} parent=1 // pred_check
      _
    $region19: #{att_layer_forward.1} parent=1 // pred_check_branch
      %51 = sbr.rel (0) target = $region21
    $region20: #{att_layer_forward.1} parent=1 // pred_region
      %52 = dma.done [#allocation3], 256
    $region21: #{att_layer_forward.1} parent=1 // pred_fallthru
      _
    // Predicated region
    $region22: #{att_layer_forward.1} parent=1 // pred_check
      _
    $region23: #{att_layer_forward.1} parent=1 // pred_check_branch
      %54 = sbr.rel (0) target = $region25
    $region24: #{att_layer_forward.1} parent=1 // pred_region
      %55 = dma.done [#allocation6], 1024
    $region25: #{att_layer_forward.1} parent=1 // pred_fallthru
      _
    // Predicated region
    $region26: #{att_layer_forward.1} parent=1 // pred_check
      _
    $region27: #{att_layer_forward.1} parent=1 // pred_check_branch
      %57 = sbr.rel (0) target = $region29
    $region28: #{att_layer_forward.1} parent=1 // pred_region
      %58 = dma.done [#allocation6], 4224
    $region29: #{att_layer_forward.1} parent=1 // pred_fallthru
      _
    %v59 = vld [vmem:[#allocation2] sm:$0xff]
    %v60 = vld [vmem:[#allocation2 + $0x8] sm:$0xff]
    %vm61 = vcmask 261120
    %v62 = vsel %vm61, %v59, 0.0
    %v63 = vsel %vm61, %v60, 0.0
    %vm64 = vcmask 523264
    %v65 = vsel %vm64, %v62, 0.0
    %v66 = vsel %vm64, %v63, 0.0
    %vm67 = vcmask 785408
    %v68 = vsel %vm67, %v65, 0.0
    %v69 = vsel %vm67, %v66, 0.0
    %72 = vrot.lane.b32.xlu0 %v59, 32
    %v73 = vpop.permute.xlu0 %72
    %74 = vrot.lane.b32.xlu0 %v60, 32
    %v75 = vpop.permute.xlu0 %74
    %v78 = vsel %vm61, 0.0, %v73
    %v79 = vsel %vm61, 0.0, %v75
    %v80 = vsel %vm64, %v78, 0.0
    %v81 = vsel %vm64, %v79, 0.0
    %v82 = vsel %vm67, %v80, 0.0
    %v83 = vsel %vm67, %v81, 0.0
    %84 = vrot.lane.b32.xlu0 %v59, 64
    %v85 = vpop.permute.xlu0 %84
    %86 = vrot.lane.b32.xlu0 %v60, 64
    %v87 = vpop.permute.xlu0 %86
    %v90 = vsel %vm64, 0.0, %v85
    %v91 = vsel %vm64, 0.0, %v87
    %v92 = vsel %vm67, %v90, 0.0
    %v93 = vsel %vm67, %v91, 0.0
    %94 = vrot.lane.b32.xlu0 %v59, 96
    %v95 = vpop.permute.xlu0 %94
    %96 = vrot.lane.b32.xlu0 %v60, 96
    %v97 = vpop.permute.xlu0 %96
    %v100 = vsel %vm67, 0.0, %v95
    %v101 = vsel %vm67, 0.0, %v97
    %v102 = vld [vmem:[#allocation7] sm:$0xff]
    %v103 = vld [vmem:[#allocation7 + $0x8] sm:$0xff]
    %v104 = vld [vmem:[#allocation7 + $0x10] sm:$0xff]
    %v105 = vld [vmem:[#allocation7 + $0x18] sm:$0xff]
    %v106 = vld [vmem:[#allocation7 + $0x20] sm:$0xff]
    %v107 = vld [vmem:[#allocation7 + $0x28] sm:$0xff]
    %v108 = vld [vmem:[#allocation7 + $0x30] sm:$0xff]
    %v109 = vld [vmem:[#allocation7 + $0x38] sm:$0xff]
    %v110 = vld [vmem:[#allocation7 + $0x40] sm:$0xff]
    %v111 = vld [vmem:[#allocation7 + $0x48] sm:$0xff]
    %v112 = vld [vmem:[#allocation7 + $0x50] sm:$0xff]
    %v113 = vld [vmem:[#allocation7 + $0x58] sm:$0xff]
    %v114 = vld [vmem:[#allocation7 + $0x60] sm:$0xff]
    %v115 = vld [vmem:[#allocation7 + $0x68] sm:$0xff]
    %v116 = vld [vmem:[#allocation7 + $0x70] sm:$0xff]
    %v117 = vld [vmem:[#allocation7 + $0x78] sm:$0xff]
    %v118 = vld [vmem:[#allocation7 + $0x80] sm:$0xff]
    %v119 = vld [vmem:[#allocation7 + $0x88] sm:$0xff]
    %v120 = vld [vmem:[#allocation7 + $0x90] sm:$0xff]
    %v121 = vld [vmem:[#allocation7 + $0x98] sm:$0xff]
    %v122 = vld [vmem:[#allocation7 + $0xa0] sm:$0xff]
    %v123 = vld [vmem:[#allocation7 + $0xa8] sm:$0xff]
    %v124 = vld [vmem:[#allocation7 + $0xb0] sm:$0xff]
    %v125 = vld [vmem:[#allocation7 + $0xb8] sm:$0xff]
    %126 = vmatprep.subr.mxu0 0.0
    %127 = vmatpush1.msra.mxu0 %v117
    %128 = vmatprep.subr.mxu0 0.0
    %129 = vmatpush1.msra.mxu0 %v116
    %130 = vmatprep.subr.mxu0 0.0
    %131 = vmatpush1.msra.mxu0 %v115
    %132 = vmatprep.subr.mxu0 0.0
    %133 = vmatpush1.msra.mxu0 %v114
    %134 = vmatprep.subr.mxu0 0.0
    %135 = vmatpush1.msra.mxu0 %v113
    %136 = vmatprep.subr.mxu0 0.0
    %137 = vmatpush1.msra.mxu0 %v112
    %138 = vmatprep.subr.mxu0 0.0
    %139 = vmatpush1.msra.mxu0 %v111
    %140 = vmatprep.subr.mxu0 0.0
    %141 = vmatpush1.msra.mxu0 %v110
    %142 = vmatprep.subr.mxu0 0.0
    %143 = vmatpush1.msra.mxu0 %v109
    %144 = vmatprep.subr.mxu0 0.0
    %145 = vmatpush1.msra.mxu0 %v108
    %146 = vmatprep.subr.mxu0 0.0
    %147 = vmatpush1.msra.mxu0 %v107
    %148 = vmatprep.subr.mxu0 0.0
    %149 = vmatpush1.msra.mxu0 %v106
    %150 = vmatprep.subr.mxu0 0.0
    %151 = vmatpush1.msra.mxu0 %v105
    %152 = vmatprep.subr.mxu0 0.0
    %153 = vmatpush1.msra.mxu0 %v104
    %154 = vmatprep.subr.mxu0 0.0
    %155 = vmatpush1.msra.mxu0 %v103
    %156 = vmatprep.subr.mxu0 0.0
    %157 = vmatpush1.msra.mxu0 %v102
    %158 = vmatprep.subr.mxu0 0.0
    %159 = vmatpush2.msra.mxu0 0.0
    %160 = vmatprep.subr.mxu0 0.0
    %161 = vmatpush2.msra.mxu0 0.0
    %162 = vmatprep.subr.mxu0 0.0
    %163 = vmatpush2.msra.mxu0 0.0
    %164 = vmatprep.subr.mxu0 0.0
    %165 = vmatpush2.msra.mxu0 0.0
    %166 = vmatprep.subr.mxu0 0.0
    %167 = vmatpush2.msra.mxu0 0.0
    %168 = vmatprep.subr.mxu0 0.0
    %169 = vmatpush2.msra.mxu0 0.0
    %170 = vmatprep.subr.mxu0 0.0
    %171 = vmatpush2.msra.mxu0 0.0
    %172 = vmatprep.subr.mxu0 0.0
    %173 = vmatpush2.msra.mxu0 0.0
    %174 = vmatprep.subr.mxu0 0.0
    %175 = vmatpush2.msra.mxu0 0.0
    %176 = vmatprep.subr.mxu0 0.0
    %177 = vmatpush2.msra.mxu0 0.0
    %178 = vmatprep.subr.mxu0 0.0
    %179 = vmatpush2.msra.mxu0 0.0
    %180 = vmatprep.subr.mxu0 0.0
    %181 = vmatpush2.msra.mxu0 0.0
    %182 = vmatprep.subr.mxu0 0.0
    %183 = vmatpush2.msra.mxu0 0.0
    %184 = vmatprep.subr.mxu0 0.0
    %185 = vmatpush2.msra.mxu0 0.0
    %186 = vmatprep.subr.mxu0 0.0
    %187 = vmatpush2.msra.mxu0 0.0
    %188 = vmatprep.subr.mxu0 0.0
    %189 = vmatpush2.msra.mxu0 0.0
    %190 = vmatprep.mubr.f32.mxu0 0.0
    %191 = vmatmul.mubr.f32.gmra.mxu0 %v68
    %v192 = vpop.f32.mrf.mxu0
    %v193 = vadd.f32 %v118, %v192
    %v194 = vpop.f32.mrf.mxu0
    %195 = vmatprep.mubr.f32.mxu0 0.0
    %196 = vmatmul.mubr.f32.gmra.mxu0 %v69
    %v197 = vpop.f32.mrf.mxu0
    %v198 = vadd.f32 %v119, %v197
    %v199 = vpop.f32.mrf.mxu0
    %200 = vmatprep.mubr.f32.mxu0 0.0
    %201 = vmatmul.mubr.f32.gmra.mxu0 %v82
    %v202 = vpop.f32.mrf.mxu0
    %v203 = vadd.f32 %v120, %v202
    %v204 = vpop.f32.mrf.mxu0
    %205 = vmatprep.mubr.f32.mxu0 0.0
    %206 = vmatmul.mubr.f32.gmra.mxu0 %v83
    %v207 = vpop.f32.mrf.mxu0
    %v208 = vadd.f32 %v121, %v207
    %v209 = vpop.f32.mrf.mxu0
    %210 = vmatprep.mubr.f32.mxu0 0.0
    %211 = vmatmul.mubr.f32.gmra.mxu0 %v92
    %v212 = vpop.f32.mrf.mxu0
    %v213 = vadd.f32 %v122, %v212
    %v214 = vpop.f32.mrf.mxu0
    %215 = vmatprep.mubr.f32.mxu0 0.0
    %216 = vmatmul.mubr.f32.gmra.mxu0 %v93
    %v217 = vpop.f32.mrf.mxu0
    %v218 = vadd.f32 %v123, %v217
    %v219 = vpop.f32.mrf.mxu0
    %220 = vmatprep.mubr.f32.mxu0 0.0
    %221 = vmatmul.mubr.f32.gmra.mxu0 %v100
    %v222 = vpop.f32.mrf.mxu0
    %v223 = vadd.f32 %v124, %v222
    %v224 = vpop.f32.mrf.mxu0
    %225 = vmatprep.mubr.f32.mxu0 0.0
    %226 = vmatmul.mubr.f32.gmra.mxu0 %v101
    %v227 = vpop.f32.mrf.mxu0
    %v228 = vadd.f32 %v125, %v227
    %v229 = vpop.f32.mrf.mxu0
    %230 = vdwg.mxu0
    %v231 = vld [vmem:[#allocation5] sm:$0xff]
    %v232 = vld [vmem:[#allocation5 + $0x8] sm:$0xff]
    %v233 = vld [vmem:[#allocation5 + $0x10] sm:$0xff]
    %v234 = vld [vmem:[#allocation5 + $0x18] sm:$0xff]
    %v235 = vld [vmem:[#allocation5 + $0x20] sm:$0xff]
    %v236 = vld [vmem:[#allocation5 + $0x28] sm:$0xff]
    %v237 = vld [vmem:[#allocation5 + $0x30] sm:$0xff]
    %v238 = vld [vmem:[#allocation5 + $0x38] sm:$0xff]
    %v239 = vsub.f32 %v231, 1.0
    %v240 = vsub.f32 %v232, 1.0
    %v241 = vsub.f32 %v233, 1.0
    %v242 = vsub.f32 %v234, 1.0
    %v243 = vsub.f32 %v235, 1.0
    %v244 = vsub.f32 %v236, 1.0
    %v245 = vsub.f32 %v237, 1.0
    %v246 = vsub.f32 %v238, 1.0
    %v247 = vmul.f32 %v239, 1e+30
    %v248 = vmul.f32 %v240, 1e+30
    %v249 = vmul.f32 %v241, 1e+30
    %v250 = vmul.f32 %v242, 1e+30
    %v251 = vmul.f32 %v243, 1e+30
    %v252 = vmul.f32 %v244, 1e+30
    %v253 = vmul.f32 %v245, 1e+30
    %v254 = vmul.f32 %v246, 1e+30
    %263 = vrot.lane.b32.xlu0 %v193, 96
    %v264 = vpop.permute.xlu0 %263
    %265 = vrot.lane.b32.xlu0 %v198, 96
    %v266 = vpop.permute.xlu0 %265
    %267 = vrot.lane.b32.xlu0 %v203, 96
    %v268 = vpop.permute.xlu0 %267
    %269 = vrot.lane.b32.xlu0 %v208, 96
    %v270 = vpop.permute.xlu0 %269
    %271 = vrot.lane.b32.xlu0 %v213, 96
    %v272 = vpop.permute.xlu0 %271
    %273 = vrot.lane.b32.xlu0 %v218, 96
    %v274 = vpop.permute.xlu0 %273
    %275 = vrot.lane.b32.xlu0 %v223, 96
    %v276 = vpop.permute.xlu0 %275
    %277 = vrot.lane.b32.xlu0 %v228, 96
    %v278 = vpop.permute.xlu0 %277
    %v279 = vsel %vm61, %v193, 0
    %v281 = vsel %vm61, %v198, 0
    %v283 = vsel %vm61, %v203, 0
    %v285 = vsel %vm61, %v208, 0
    %v287 = vsel %vm61, %v213, 0
    %v289 = vsel %vm61, %v218, 0
    %v291 = vsel %vm61, %v223, 0
    %v293 = vsel %vm61, %v228, 0
    %v295 = vsel %vm61, %v264, 0
    %v297 = vsel %vm61, %v266, 0
    %v299 = vsel %vm61, %v268, 0
    %v301 = vsel %vm61, %v270, 0
    %v303 = vsel %vm61, %v272, 0
    %v305 = vsel %vm61, %v274, 0
    %v307 = vsel %vm61, %v276, 0
    %v309 = vsel %vm61, %v278, 0
    %311 = vmatprep.subr.mxu0 0.0
    %312 = vmatpush1.xpose.msra.mxu0 0.0
    %313 = vmatprep.subr.mxu0 0.0
    %314 = vmatpush1.xpose.msra.mxu0 0.0
    %315 = vmatprep.subr.mxu0 0.0
    %316 = vmatpush1.xpose.msra.mxu0 0.0
    %317 = vmatprep.subr.mxu0 0.0
    %318 = vmatpush1.xpose.msra.mxu0 0.0
    %319 = vmatprep.subr.mxu0 0.0
    %320 = vmatpush1.xpose.msra.mxu0 0.0
    %321 = vmatprep.subr.mxu0 0.0
    %322 = vmatpush1.xpose.msra.mxu0 0.0
    %323 = vmatprep.subr.mxu0 0.0
    %324 = vmatpush1.xpose.msra.mxu0 0.0
    %325 = vmatprep.subr.mxu0 0.0
    %326 = vmatpush1.xpose.msra.mxu0 0.0
    %327 = vmatprep.subr.mxu0 0.0
    %328 = vmatpush1.xpose.msra.mxu0 %v309
    %329 = vmatprep.subr.mxu0 0.0
    %330 = vmatpush1.xpose.msra.mxu0 %v307
    %331 = vmatprep.subr.mxu0 0.0
    %332 = vmatpush1.xpose.msra.mxu0 %v305
    %333 = vmatprep.subr.mxu0 0.0
    %334 = vmatpush1.xpose.msra.mxu0 %v303
    %335 = vmatprep.subr.mxu0 0.0
    %336 = vmatpush1.xpose.msra.mxu0 %v301
    %337 = vmatprep.subr.mxu0 0.0
    %338 = vmatpush1.xpose.msra.mxu0 %v299
    %339 = vmatprep.subr.mxu0 0.0
    %340 = vmatpush1.xpose.msra.mxu0 %v297
    %341 = vmatprep.subr.mxu0 0.0
    %342 = vmatpush1.xpose.msra.mxu0 %v295
    %343 = vmatprep.subr.mxu0 0.0
    %344 = vmatpush2.xpose.msra.mxu0 0.0
    %345 = vmatprep.subr.mxu0 0.0
    %346 = vmatpush2.xpose.msra.mxu0 0.0
    %347 = vmatprep.subr.mxu0 0.0
    %348 = vmatpush2.xpose.msra.mxu0 0.0
    %349 = vmatprep.subr.mxu0 0.0
    %350 = vmatpush2.xpose.msra.mxu0 0.0
    %351 = vmatprep.subr.mxu0 0.0
    %352 = vmatpush2.xpose.msra.mxu0 0.0
    %353 = vmatprep.subr.mxu0 0.0
    %354 = vmatpush2.xpose.msra.mxu0 0.0
    %355 = vmatprep.subr.mxu0 0.0
    %356 = vmatpush2.xpose.msra.mxu0 0.0
    %357 = vmatprep.subr.mxu0 0.0
    %358 = vmatpush2.xpose.msra.mxu0 0.0
    %359 = vmatprep.subr.mxu0 0.0
    %360 = vmatpush2.xpose.msra.mxu0 0.0
    %361 = vmatprep.subr.mxu0 0.0
    %362 = vmatpush2.xpose.msra.mxu0 0.0
    %363 = vmatprep.subr.mxu0 0.0
    %364 = vmatpush2.xpose.msra.mxu0 0.0
    %365 = vmatprep.subr.mxu0 0.0
    %366 = vmatpush2.xpose.msra.mxu0 0.0
    %367 = vmatprep.subr.mxu0 0.0
    %368 = vmatpush2.xpose.msra.mxu0 0.0
    %369 = vmatprep.subr.mxu0 0.0
    %370 = vmatpush2.xpose.msra.mxu0 0.0
    %371 = vmatprep.subr.mxu0 0.0
    %372 = vmatpush2.xpose.msra.mxu0 0.0
    %373 = vmatprep.subr.mxu0 0.0
    %374 = vmatpush2.xpose.msra.mxu0 0.0
    %375 = vmatprep.mubr.f32.mxu0 0.0
    %376 = vmatmul.mubr.f32.gmra.mxu0 %v279
    %v377 = vpop.f32.mrf.mxu0
    %v378 = vadd.f32 %v247, %v377
    %v379 = vpop.f32.mrf.mxu0
    %380 = vmatprep.mubr.f32.mxu0 0.0
    %381 = vmatmul.mubr.f32.gmra.mxu0 %v281
    %v382 = vpop.f32.mrf.mxu0
    %v383 = vadd.f32 %v248, %v382
    %v384 = vpop.f32.mrf.mxu0
    %385 = vmatprep.mubr.f32.mxu0 0.0
    %386 = vmatmul.mubr.f32.gmra.mxu0 %v283
    %v387 = vpop.f32.mrf.mxu0
    %v388 = vadd.f32 %v249, %v387
    %v389 = vpop.f32.mrf.mxu0
    %390 = vmatprep.mubr.f32.mxu0 0.0
    %391 = vmatmul.mubr.f32.gmra.mxu0 %v285
    %v392 = vpop.f32.mrf.mxu0
    %v393 = vadd.f32 %v250, %v392
    %v394 = vpop.f32.mrf.mxu0
    %395 = vmatprep.mubr.f32.mxu0 0.0
    %396 = vmatmul.mubr.f32.gmra.mxu0 %v287
    %v397 = vpop.f32.mrf.mxu0
    %v398 = vadd.f32 %v251, %v397
    %v399 = vpop.f32.mrf.mxu0
    %400 = vmatprep.mubr.f32.mxu0 0.0
    %401 = vmatmul.mubr.f32.gmra.mxu0 %v289
    %v402 = vpop.f32.mrf.mxu0
    %v403 = vadd.f32 %v252, %v402
    %v404 = vpop.f32.mrf.mxu0
    %405 = vmatprep.mubr.f32.mxu0 0.0
    %406 = vmatmul.mubr.f32.gmra.mxu0 %v291
    %v407 = vpop.f32.mrf.mxu0
    %v408 = vadd.f32 %v253, %v407
    %v409 = vpop.f32.mrf.mxu0
    %410 = vmatprep.mubr.f32.mxu0 0.0
    %411 = vmatmul.mubr.f32.gmra.mxu0 %v293
    %v412 = vpop.f32.mrf.mxu0
    %v413 = vadd.f32 %v254, %v412
    %v414 = vpop.f32.mrf.mxu0
    %415 = vdwg.mxu0
    %v416 = vsel %vm64, %v378, -inf
    %417 = vmax.xlane.f32.xlu0 %v416
    %v418 = vpop.xlane.xlu0 %417
    %v419 = vsel %vm64, %v383, -inf
    %420 = vmax.xlane.f32.xlu0 %v419
    %v421 = vpop.xlane.xlu0 %420
    %v422 = vsel %vm64, %v388, -inf
    %423 = vmax.xlane.f32.xlu0 %v422
    %v424 = vpop.xlane.xlu0 %423
    %v425 = vsel %vm64, %v393, -inf
    %426 = vmax.xlane.f32.xlu0 %v425
    %v427 = vpop.xlane.xlu0 %426
    %v428 = vsel %vm64, %v398, -inf
    %429 = vmax.xlane.f32.xlu0 %v428
    %v430 = vpop.xlane.xlu0 %429
    %v431 = vsel %vm64, %v403, -inf
    %432 = vmax.xlane.f32.xlu0 %v431
    %v433 = vpop.xlane.xlu0 %432
    %v434 = vsel %vm64, %v408, -inf
    %435 = vmax.xlane.f32.xlu0 %v434
    %v436 = vpop.xlane.xlu0 %435
    %v437 = vsel %vm64, %v413, -inf
    %438 = vmax.xlane.f32.xlu0 %v437
    %v439 = vpop.xlane.xlu0 %438
    %v440 = vsub.f32 %v378, %v418
    %v441 = vsub.f32 %v383, %v421
    %v442 = vsub.f32 %v388, %v424
    %v443 = vsub.f32 %v393, %v427
    %v444 = vsub.f32 %v398, %v430
    %v445 = vsub.f32 %v403, %v433
    %v446 = vsub.f32 %v408, %v436
    %v447 = vsub.f32 %v413, %v439
    %v448 = vmul.f32 %v440, 1.442695
    %v449 = vpow.pop %v448
    %v450 = vmul.f32 %v441, 1.442695
    %v451 = vpow.pop %v450
    %v452 = vmul.f32 %v442, 1.442695
    %v453 = vpow.pop %v452
    %v454 = vmul.f32 %v443, 1.442695
    %v455 = vpow.pop %v454
    %v456 = vmul.f32 %v444, 1.442695
    %v457 = vpow.pop %v456
    %v458 = vmul.f32 %v445, 1.442695
    %v459 = vpow.pop %v458
    %v460 = vmul.f32 %v446, 1.442695
    %v461 = vpow.pop %v460
    %v462 = vmul.f32 %v447, 1.442695
    %v463 = vpow.pop %v462
    %v464 = vmul.f32 %v231, %v449
    %v465 = vmul.f32 %v232, %v451
    %v466 = vmul.f32 %v233, %v453
    %v467 = vmul.f32 %v234, %v455
    %v468 = vmul.f32 %v235, %v457
    %v469 = vmul.f32 %v236, %v459
    %v470 = vmul.f32 %v237, %v461
    %v471 = vmul.f32 %v238, %v463
    %v472 = vsel %vm64, %v464, 0.0
    %473 = vadd.xlane.f32.xlu0 %v472
    %v474 = vpop.xlane.xlu0 %473
    %v475 = vsel %vm64, %v465, 0.0
    %476 = vadd.xlane.f32.xlu0 %v475
    %v477 = vpop.xlane.xlu0 %476
    %v478 = vsel %vm64, %v466, 0.0
    %479 = vadd.xlane.f32.xlu0 %v478
    %v480 = vpop.xlane.xlu0 %479
    %v481 = vsel %vm64, %v467, 0.0
    %482 = vadd.xlane.f32.xlu0 %v481
    %v483 = vpop.xlane.xlu0 %482
    %v484 = vsel %vm64, %v468, 0.0
    %485 = vadd.xlane.f32.xlu0 %v484
    %v486 = vpop.xlane.xlu0 %485
    %v487 = vsel %vm64, %v469, 0.0
    %488 = vadd.xlane.f32.xlu0 %v487
    %v489 = vpop.xlane.xlu0 %488
    %v490 = vsel %vm64, %v470, 0.0
    %491 = vadd.xlane.f32.xlu0 %v490
    %v492 = vpop.xlane.xlu0 %491
    %v493 = vsel %vm64, %v471, 0.0
    %494 = vadd.xlane.f32.xlu0 %v493
    %v495 = vpop.xlane.xlu0 %494
    %v496 = vmax.f32 %v474, 1e-30
    %v497 = vmax.f32 %v477, 1e-30
    %v498 = vmax.f32 %v480, 1e-30
    %v499 = vmax.f32 %v483, 1e-30
    %v500 = vmax.f32 %v486, 1e-30
    %v501 = vmax.f32 %v489, 1e-30
    %v502 = vmax.f32 %v492, 1e-30
    %v503 = vmax.f32 %v495, 1e-30
    %v504 = vrcp.pop %v496
    %v505 = vrcp.pop %v497
    %v506 = vrcp.pop %v498
    %v507 = vrcp.pop %v499
    %v508 = vrcp.pop %v500
    %v509 = vrcp.pop %v501
    %v510 = vrcp.pop %v502
    %v511 = vrcp.pop %v503
    %v512 = vmul.f32 %v464, %v504
    %v513 = vmul.f32 %v465, %v505
    %v514 = vmul.f32 %v466, %v506
    %v515 = vmul.f32 %v467, %v507
    %v516 = vmul.f32 %v468, %v508
    %v517 = vmul.f32 %v469, %v509
    %v518 = vmul.f32 %v470, %v510
    %v519 = vmul.f32 %v471, %v511
    %520 = vrot.lane.b32.xlu0 %v193, 64
    %v521 = vpop.permute.xlu0 %520
    %522 = vrot.lane.b32.xlu0 %v198, 64
    %v523 = vpop.permute.xlu0 %522
    %524 = vrot.lane.b32.xlu0 %v203, 64
    %v525 = vpop.permute.xlu0 %524
    %526 = vrot.lane.b32.xlu0 %v208, 64
    %v527 = vpop.permute.xlu0 %526
    %528 = vrot.lane.b32.xlu0 %v213, 64
    %v529 = vpop.permute.xlu0 %528
    %530 = vrot.lane.b32.xlu0 %v218, 64
    %v531 = vpop.permute.xlu0 %530
    %532 = vrot.lane.b32.xlu0 %v223, 64
    %v533 = vpop.permute.xlu0 %532
    %534 = vrot.lane.b32.xlu0 %v228, 64
    %v535 = vpop.permute.xlu0 %534
    %v545 = vsel %vm64, %v512, 0
    %v548 = vsel %vm64, %v513, 0
    %v551 = vsel %vm64, %v514, 0
    %v554 = vsel %vm64, %v515, 0
    %v557 = vsel %vm64, %v516, 0
    %v560 = vsel %vm64, %v517, 0
    %v563 = vsel %vm64, %v518, 0
    %v566 = vsel %vm64, %v519, 0
    %568 = vmatprep.subr.mxu0 0.0
    %569 = vmatpush1.msra.mxu0 0.0
    %570 = vmatprep.subr.mxu0 0.0
    %571 = vmatpush1.msra.mxu0 0.0
    %572 = vmatprep.subr.mxu0 0.0
    %573 = vmatpush1.msra.mxu0 0.0
    %574 = vmatprep.subr.mxu0 0.0
    %575 = vmatpush1.msra.mxu0 0.0
    %576 = vmatprep.subr.mxu0 0.0
    %577 = vmatpush1.msra.mxu0 0.0
    %578 = vmatprep.subr.mxu0 0.0
    %579 = vmatpush1.msra.mxu0 0.0
    %580 = vmatprep.subr.mxu0 0.0
    %581 = vmatpush1.msra.mxu0 0.0
    %582 = vmatprep.subr.mxu0 0.0
    %583 = vmatpush1.msra.mxu0 0.0
    %584 = vmatprep.subr.mxu0 0.0
    %585 = vmatpush1.msra.mxu0 %v535
    %586 = vmatprep.subr.mxu0 0.0
    %587 = vmatpush1.msra.mxu0 %v533
    %588 = vmatprep.subr.mxu0 0.0
    %589 = vmatpush1.msra.mxu0 %v531
    %590 = vmatprep.subr.mxu0 0.0
    %591 = vmatpush1.msra.mxu0 %v529
    %592 = vmatprep.subr.mxu0 0.0
    %593 = vmatpush1.msra.mxu0 %v527
    %594 = vmatprep.subr.mxu0 0.0
    %595 = vmatpush1.msra.mxu0 %v525
    %596 = vmatprep.subr.mxu0 0.0
    %597 = vmatpush1.msra.mxu0 %v523
    %598 = vmatprep.subr.mxu0 0.0
    %599 = vmatpush1.msra.mxu0 %v521
    %600 = vmatprep.subr.mxu0 0.0
    %601 = vmatpush2.msra.mxu0 0.0
    %602 = vmatprep.subr.mxu0 0.0
    %603 = vmatpush2.msra.mxu0 0.0
    %604 = vmatprep.subr.mxu0 0.0
    %605 = vmatpush2.msra.mxu0 0.0
    %606 = vmatprep.subr.mxu0 0.0
    %607 = vmatpush2.msra.mxu0 0.0
    %608 = vmatprep.subr.mxu0 0.0
    %609 = vmatpush2.msra.mxu0 0.0
    %610 = vmatprep.subr.mxu0 0.0
    %611 = vmatpush2.msra.mxu0 0.0
    %612 = vmatprep.subr.mxu0 0.0
    %613 = vmatpush2.msra.mxu0 0.0
    %614 = vmatprep.subr.mxu0 0.0
    %615 = vmatpush2.msra.mxu0 0.0
    %616 = vmatprep.subr.mxu0 0.0
    %617 = vmatpush2.msra.mxu0 0.0
    %618 = vmatprep.subr.mxu0 0.0
    %619 = vmatpush2.msra.mxu0 0.0
    %620 = vmatprep.subr.mxu0 0.0
    %621 = vmatpush2.msra.mxu0 0.0
    %622 = vmatprep.subr.mxu0 0.0
    %623 = vmatpush2.msra.mxu0 0.0
    %624 = vmatprep.subr.mxu0 0.0
    %625 = vmatpush2.msra.mxu0 0.0
    %626 = vmatprep.subr.mxu0 0.0
    %627 = vmatpush2.msra.mxu0 0.0
    %628 = vmatprep.subr.mxu0 0.0
    %629 = vmatpush2.msra.mxu0 0.0
    %630 = vmatprep.subr.mxu0 0.0
    %631 = vmatpush2.msra.mxu0 0.0
    %632 = vmatprep.mubr.f32.mxu0 0.0
    %633 = vmatmul.mubr.f32.gmra.mxu0 %v545
    %v634 = vpop.f32.mrf.mxu0
    %v635 = vadd.f32 0.0, %v634
    %v636 = vpop.f32.mrf.mxu0
    %637 = vmatprep.mubr.f32.mxu0 0.0
    %638 = vmatmul.mubr.f32.gmra.mxu0 %v548
    %v639 = vpop.f32.mrf.mxu0
    %v640 = vadd.f32 0.0, %v639
    %v641 = vpop.f32.mrf.mxu0
    %642 = vmatprep.mubr.f32.mxu0 0.0
    %643 = vmatmul.mubr.f32.gmra.mxu0 %v551
    %v644 = vpop.f32.mrf.mxu0
    %v645 = vadd.f32 0.0, %v644
    %v646 = vpop.f32.mrf.mxu0
    %647 = vmatprep.mubr.f32.mxu0 0.0
    %648 = vmatmul.mubr.f32.gmra.mxu0 %v554
    %v649 = vpop.f32.mrf.mxu0
    %v650 = vadd.f32 0.0, %v649
    %v651 = vpop.f32.mrf.mxu0
    %652 = vmatprep.mubr.f32.mxu0 0.0
    %653 = vmatmul.mubr.f32.gmra.mxu0 %v557
    %v654 = vpop.f32.mrf.mxu0
    %v655 = vadd.f32 0.0, %v654
    %v656 = vpop.f32.mrf.mxu0
    %657 = vmatprep.mubr.f32.mxu0 0.0
    %658 = vmatmul.mubr.f32.gmra.mxu0 %v560
    %v659 = vpop.f32.mrf.mxu0
    %v660 = vadd.f32 0.0, %v659
    %v661 = vpop.f32.mrf.mxu0
    %662 = vmatprep.mubr.f32.mxu0 0.0
    %663 = vmatmul.mubr.f32.gmra.mxu0 %v563
    %v664 = vpop.f32.mrf.mxu0
    %v665 = vadd.f32 0.0, %v664
    %v666 = vpop.f32.mrf.mxu0
    %667 = vmatprep.mubr.f32.mxu0 0.0
    %668 = vmatmul.mubr.f32.gmra.mxu0 %v566
    %v669 = vpop.f32.mrf.mxu0
    %v670 = vadd.f32 0.0, %v669
    %v671 = vpop.f32.mrf.mxu0
    %672 = vdwg.mxu0
    %675 = vrot.lane.b32.xlu0 %v635, 96
    %v676 = vpop.permute.xlu0 %675
    %677 = vrot.lane.b32.xlu0 %v640, 96
    %v678 = vpop.permute.xlu0 %677
    %v681 = vadd.f32 %v193, %v676
    %v682 = vadd.f32 %v198, %v678
    %685 = vrot.lane.b32.xlu0 %v645, 96
    %v686 = vpop.permute.xlu0 %685
    %687 = vrot.lane.b32.xlu0 %v650, 96
    %v688 = vpop.permute.xlu0 %687
    %v691 = vadd.f32 %v681, %v686
    %v692 = vadd.f32 %v682, %v688
    %695 = vrot.lane.b32.xlu0 %v655, 96
    %v696 = vpop.permute.xlu0 %695
    %697 = vrot.lane.b32.xlu0 %v660, 96
    %v698 = vpop.permute.xlu0 %697
    %v701 = vadd.f32 %v691, %v696
    %v702 = vadd.f32 %v692, %v698
    %705 = vrot.lane.b32.xlu0 %v665, 96
    %v706 = vpop.permute.xlu0 %705
    %707 = vrot.lane.b32.xlu0 %v670, 96
    %v708 = vpop.permute.xlu0 %707
    %v711 = vadd.f32 %v701, %v706
    %v712 = vadd.f32 %v702, %v708
    %v713 = vld [vmem:[%s1] sm:$0x1]
    %v715 = vlaneseq
    %v716 = vshrl.u32 %v715, 7
    %v717 = vsub.s32 0, %v716
    %v718 = vrot.slane %v713, %v717
    %721 = vrot.lane.b32.xlu0 %v711, 32
    %v722 = vpop.permute.xlu0 %721
    %723 = vrot.lane.b32.xlu0 %v712, 32
    %v724 = vpop.permute.xlu0 %723
    %727 = vrot.lane.b32.xlu0 %v718, 32
    %v728 = vpop.permute.xlu0 %727
    %v730 = vsel %vm61, %v722, %v728
    %v731 = vsel %vm61, %v724, %v728
    %v732 = vld [vmem:[#allocation7 + $0xc0] sm:$0xff]
    %v733 = vld [vmem:[#allocation7 + $0xc8] sm:$0xff]
    %v734 = vld [vmem:[#allocation7 + $0xd0] sm:$0xff]
    %v735 = vld [vmem:[#allocation7 + $0xd8] sm:$0xff]
    %v736 = vld [vmem:[#allocation7 + $0xe0] sm:$0xff]
    %v737 = vld [vmem:[#allocation7 + $0xe8] sm:$0xff]
    %v738 = vld [vmem:[#allocation7 + $0xf0] sm:$0x1]
    %v739 = vlaneseq
    %v740 = vshrl.u32 %v739, 7
    %v741 = vsub.s32 0, %v740
    %v742 = vrot.slane %v738, %v741
    %vm743 = vcmask 392192
    %v745 = vsel %vm743, %v730, 0
    %v748 = vsel %vm743, %v731, 0
    %750 = vmatprep.subr.mxu0 0.0
    %751 = vmatpush1.msra.mxu0 0.0
    %752 = vmatprep.subr.mxu0 0.0
    %753 = vmatpush1.msra.mxu0 0.0
    %754 = vmatprep.subr.mxu0 0.0
    %755 = vmatpush1.msra.mxu0 0.0
    %756 = vmatprep.subr.mxu0 0.0
    %757 = vmatpush1.msra.mxu0 0.0
    %758 = vmatprep.subr.mxu0 0.0
    %759 = vmatpush1.msra.mxu0 0.0
    %760 = vmatprep.subr.mxu0 0.0
    %761 = vmatpush1.msra.mxu0 0.0
    %762 = vmatprep.subr.mxu0 0.0
    %763 = vmatpush1.msra.mxu0 0.0
    %764 = vmatprep.subr.mxu0 0.0
    %765 = vmatpush1.msra.mxu0 0.0
    %766 = vmatprep.subr.mxu0 0.0
    %767 = vmatpush1.msra.mxu0 0.0
    %768 = vmatprep.subr.mxu0 0.0
    %769 = vmatpush1.msra.mxu0 0.0
    %770 = vmatprep.subr.mxu0 0.0
    %771 = vmatpush1.msra.mxu0 %v737
    %772 = vmatprep.subr.mxu0 0.0
    %773 = vmatpush1.msra.mxu0 %v736
    %774 = vmatprep.subr.mxu0 0.0
    %775 = vmatpush1.msra.mxu0 %v735
    %776 = vmatprep.subr.mxu0 0.0
    %777 = vmatpush1.msra.mxu0 %v734
    %778 = vmatprep.subr.mxu0 0.0
    %779 = vmatpush1.msra.mxu0 %v733
    %780 = vmatprep.subr.mxu0 0.0
    %781 = vmatpush1.msra.mxu0 %v732
    %782 = vmatprep.subr.mxu0 0.0
    %783 = vmatpush2.msra.mxu0 0.0
    %784 = vmatprep.subr.mxu0 0.0
    %785 = vmatpush2.msra.mxu0 0.0
    %786 = vmatprep.subr.mxu0 0.0
    %787 = vmatpush2.msra.mxu0 0.0
    %788 = vmatprep.subr.mxu0 0.0
    %789 = vmatpush2.msra.mxu0 0.0
    %790 = vmatprep.subr.mxu0 0.0
    %791 = vmatpush2.msra.mxu0 0.0
    %792 = vmatprep.subr.mxu0 0.0
    %793 = vmatpush2.msra.mxu0 0.0
    %794 = vmatprep.subr.mxu0 0.0
    %795 = vmatpush2.msra.mxu0 0.0
    %796 = vmatprep.subr.mxu0 0.0
    %797 = vmatpush2.msra.mxu0 0.0
    %798 = vmatprep.subr.mxu0 0.0
    %799 = vmatpush2.msra.mxu0 0.0
    %800 = vmatprep.subr.mxu0 0.0
    %801 = vmatpush2.msra.mxu0 0.0
    %802 = vmatprep.subr.mxu0 0.0
    %803 = vmatpush2.msra.mxu0 0.0
    %804 = vmatprep.subr.mxu0 0.0
    %805 = vmatpush2.msra.mxu0 0.0
    %806 = vmatprep.subr.mxu0 0.0
    %807 = vmatpush2.msra.mxu0 0.0
    %808 = vmatprep.subr.mxu0 0.0
    %809 = vmatpush2.msra.mxu0 0.0
    %810 = vmatprep.subr.mxu0 0.0
    %811 = vmatpush2.msra.mxu0 0.0
    %812 = vmatprep.subr.mxu0 0.0
    %813 = vmatpush2.msra.mxu0 0.0
    %814 = vmatprep.mubr.f32.mxu0 0.0
    %815 = vmatmul.mubr.f32.gmra.mxu0 %v745
    %v816 = vpop.f32.mrf.mxu0
    %v817 = vadd.f32 %v742, %v816
    %v818 = vpop.f32.mrf.mxu0
    %819 = vmatprep.mubr.f32.mxu0 0.0
    %820 = vmatmul.mubr.f32.gmra.mxu0 %v748
    %v821 = vpop.f32.mrf.mxu0
    %v822 = vadd.f32 %v742, %v821
    %v823 = vpop.f32.mrf.mxu0
    %824 = vdwg.mxu0
    %v825 = vmax.f32 %v817, 0.0
    %v826 = vmax.f32 %v822, 0.0
    %v827 = vsel %vm61, %v825, 0.0
    %828 = vadd.xlane.f32.xlu0 %v827
    %v829 = vpop.xlane.xlu0 %828
    %v830 = vsel %vm61, %v826, 0.0
    %831 = vadd.xlane.f32.xlu0 %v830
    %v832 = vpop.xlane.xlu0 %831
    %v833 = vrcp.pop 32.0
    %v834 = vmul.f32 %v829, %v833
    %v835 = vmul.f32 %v832, %v833
    %v836 = vsub.f32 %v825, %v834
    %v837 = vsub.f32 %v826, %v835
    %v838 = vmul.f32 %v836, %v836
    %v839 = vmul.f32 %v837, %v837
    %v840 = vsel %vm61, %v838, 0.0
    %841 = vadd.xlane.f32.xlu0 %v840
    %v842 = vpop.xlane.xlu0 %841
    %v843 = vsel %vm61, %v839, 0.0
    %844 = vadd.xlane.f32.xlu0 %v843
    %v845 = vpop.xlane.xlu0 %844
    %v846 = vmul.f32 %v842, %v833
    %v847 = vmul.f32 %v845, %v833
    %v848 = vadd.f32 %v846, 1e-05
    %v849 = vadd.f32 %v847, 1e-05
    %v850 = vrsqrt.pop %v848
    %v851 = vrsqrt.pop %v849
    %v852 = vmul.f32 %v836, %v850
    %v853 = vmul.f32 %v837, %v851
    %v854 = vld [vmem:[#allocation7 + $0xf8] sm:$0x1]
    %v855 = vlaneseq
    %v856 = vshrl.u32 %v855, 7
    %v857 = vsub.s32 0, %v856
    %v858 = vrot.slane %v854, %v857
    %v859 = vmul.f32 %v852, %v858
    %v860 = vmul.f32 %v853, %v858
    %v861 = vld [vmem:[#allocation7 + $0x100] sm:$0x1]
    %v862 = vlaneseq
    %v863 = vshrl.u32 %v862, 7
    %v864 = vsub.s32 0, %v863
    %v865 = vrot.slane %v861, %v864
    %v866 = vadd.f32 %v859, %v865
    %v867 = vadd.f32 %v860, %v865
    %868 = vst.msk [vmem:[#allocation8] sm:$0xff] %vm61, %v866
    %869 = vst.msk [vmem:[#allocation8 + $0x8] sm:$0xff] %vm61, %v867
    // Predicated region
    $region30: #{att_layer_forward.1} parent=1 // pred_check
      _
    $region31: #{att_layer_forward.1} parent=1 // pred_check_branch
      %871 = sbr.rel (0) target = $region33
    $region32: #{att_layer_forward.1} parent=1 // pred_region
      %s873 = ssub.s32 256, 256
      %874 = vsyncadd [#allocation4], %s873
      %s875 = sshll.u32 [#allocation8], 4
      %s876 = int_to_ptr.vmem [resolvable:$true] %s875
      %881 = dma.vmem_to_hbm [thread:$0]  %s876, 256, %s4, [#allocation4], 128, 128, 8
    $region33: #{att_layer_forward.1} parent=1 // pred_fallthru
      _
    // Predicated region
    $region34: #{att_layer_forward.1} parent=1 // pred_check
      _
    $region35: #{att_layer_forward.1} parent=1 // pred_check_branch
      %883 = sbr.rel (0) target = $region37
    $region36: #{att_layer_forward.1} parent=1 // pred_region
      %884 = dma.done [#allocation4], 256
    $region37: #{att_layer_forward.1} parent=1 // pred_fallthru
      _
    %885 = vsyncpa [#allocation3], 1
    %886 = vsyncpa [#allocation6], 1
    %887 = vsyncpa [#allocation4], 1

</llo_original>
